<compile_context>
chip_gen: v7x
topology: tpu7x:2x2x1
jax: 0.10.0
libtpu: 0.0.40
codegen_flags: <defaults>
</compile_context>

<pallas_src>
import functools

import jax
import jax.numpy as jnp
from jax import lax
from jax.experimental import pallas as pl
from jax.experimental.pallas import tpu as pltpu

GAMMA = 1.5
ALPHA = 0.25

_LANES = 128
_SUBLANES = 8
_MAX_BLOCK_ROWS = 2048            # 2048x128 f32 = 1 MiB per input block
_NCORES = 2                       # leading 'parallel' axis (2-TC on v7x)
_VMEM_LIMIT = 48 * 1024 * 1024    # < 64 MiB v7x physical; ample everywhere


def _cdiv(a, b):
    return (a + b - 1) // b


def _round_up(x, m):
    return _cdiv(x, m) * m


def _focal_elementwise(x, y, gamma, alpha, *, approx_recip=False):
    """Elementwise focal BCE-with-logits loss (f32 in/out).

    Shared by the kernel (approx_recip=True hot path) and the tiny jnp
    tail / fallback path (approx_recip=False; pl.reciprocal is kernel-only).
    """
    # Shared exp(-|x|) feeds both the BCE log term and sigmoid.
    e = jnp.exp(-jnp.abs(x))
    # BCEWithLogitsLoss(reduction='none'): max(x,0) - x*y + log(1 + exp(-|x|))
    bce = jnp.maximum(x, 0.0) - x * y + jnp.log1p(e)
    if approx_recip:
        inv = pl.reciprocal(1.0 + e, approx=True)   # single EUP vrcp push
    else:
        inv = 1.0 / (1.0 + e)
    p = jnp.where(x >= 0.0, inv, e * inv)           # sigmoid(x)

    # Folded focal terms:
    #   1 - p_t           = p + y - 2*p*y
    #   alpha_factor      = (1-alpha) + y*(2*alpha - 1)
    # Clamp z at 0: approx reciprocal can push p marginally past 1.
    z = jnp.maximum(p + y - 2.0 * (p * y), 0.0)
    af = (1.0 - alpha) + y * (2.0 * alpha - 1.0)
    if gamma == 1.5:
        mod = z * jnp.sqrt(z)                       # avoids exp(g*log(z))
    elif gamma == 2.0:
        mod = z * z
    elif gamma == 1.0:
        mod = z
    else:
        mod = z ** gamma
    return bce * (af * mod)


def _focal_loss_kernel(pred_ref, true_ref, out_ref, *, gamma, alpha,
                       n_blocks, steps_per_core, rows_last, block_rows,
                       guard_overflow, approx_recip):
    c = pl.program_id(0)                 # core / partial-sum index (parallel)
    i = pl.program_id(1)                 # reduction step (arbitrary)

    # Output block (8,128) is resident across the reduction axis -> accumulator.
    @pl.when(i == 0)
    def _():
        out_ref[...] = jnp.zeros_like(out_ref)

    x = pred_ref[...].astype(jnp.float32)
    y = true_ref[...].astype(jnp.float32)
    loss = _focal_elementwise(x, y, gamma, alpha, approx_recip=approx_recip)

    def _accum(v):
        # Vreg-shaped partial accumulation (pure VPU adds, no XLU reduce).
        out_ref[...] += v.reshape(-1, _SUBLANES, _LANES).sum(axis=0)

    blk = c * steps_per_core + i

    if rows_last < block_rows:
        # Interior blocks: unmasked hot path.
        @pl.when(blk < n_blocks - 1)
        def _():
            _accum(loss)

        # Final (partial) block: mask garbage rows with a local row iota vs.
        # a compile-time row count.  Clamped overflow blocks (blk >= n_blocks)
        # fall through both branches and contribute nothing.
        @pl.when(blk == n_blocks - 1)
        def _():
            row = lax.broadcasted_iota(jnp.int32, loss.shape, 0)
            _accum(jnp.where(row < rows_last, loss, 0.0))
    elif guard_overflow:
        # All real blocks are full; only skip the clamped overflow re-reads.
        @pl.when(blk < n_blocks)
        def _():
            _accum(loss)
    else:
        _accum(loss)


def focal_loss(pred, true, gamma=GAMMA, alpha=ALPHA, approx_recip=True):
    """Focal loss (BCE-with-logits base, 'mean' reduction) via Pallas.

    pred, true: same shape (e.g. NCHW), any float dtype.  Returns scalar f32.
    """
    assert pred.shape == true.shape
    n_valid = pred.size
    assert n_valid > 0

    pred_flat = pred.reshape(-1)
    true_flat = true.reshape(-1)

    rows = n_valid // _LANES
    n_main = rows * _LANES
    tail = n_valid - n_main

    # Tiny-input fallback: whole tensor is smaller than one lane row.
    if rows == 0:
        loss = _focal_elementwise(pred_flat.astype(jnp.float32),
                                  true_flat.astype(jnp.float32), gamma, alpha)
        return jnp.sum(loss) / jnp.float32(n_valid)

    tail_sum = jnp.float32(0.0)
    if tail:
        # Ragged (<128-elem) tail reduced in jnp; replaces the previous
        # full-array jnp.pad copy.  (Never triggers for lane-aligned inputs
        # such as typical NCHW feature maps.)
        tail_sum = jnp.sum(_focal_elementwise(
            pred_flat[n_main:].astype(jnp.float32),
            true_flat[n_main:].astype(jnp.float32), gamma, alpha))
        pred_flat = pred_flat[:n_main]
        true_flat = true_flat[:n_main]

    # Lane-aligned case: free reshape, zero extra HBM traffic.
    pred2d = pred_flat.reshape(rows, _LANES)
    true2d = true_flat.reshape(rows, _LANES)

    # Round block rows to the packed sublane multiple of the narrowest input
    # dtype (8 for f32, 16 for bf16, 32 for int8/fp8) so in-kernel upcasts
    # operate on whole packed tiles.
    row_align = _SUBLANES
    for dt in (pred.dtype, true.dtype):
        row_align = max(row_align,
                        _SUBLANES * max(1, 4 // jnp.dtype(dt).itemsize))

    block_rows = min(_MAX_BLOCK_ROWS, _round_up(rows, row_align))
    n_blocks = _cdiv(rows, block_rows)
    ncores = max(1, min(_NCORES, n_blocks))
    steps_per_core = _cdiv(n_blocks, ncores)
    rows_last = rows - (n_blocks - 1) * block_rows     # 1..block_rows
    guard_overflow = ncores * steps_per_core > n_blocks

    def in_map(c, i):
        # Clamp so an overflow step (when n_blocks % ncores != 0) re-reads a
        # valid block instead of issuing a fully out-of-bounds DMA; its
        # contribution is skipped in-kernel.
        return (jnp.minimum(c * steps_per_core + i, n_blocks - 1), 0)

    kernel = functools.partial(
        _focal_loss_kernel, gamma=gamma, alpha=alpha, n_blocks=n_blocks,
        steps_per_core=steps_per_core, rows_last=rows_last,
        block_rows=block_rows, guard_overflow=guard_overflow,
        approx_recip=approx_recip)

    partials = pl.pallas_call(
        kernel,
        out_shape=jax.ShapeDtypeStruct((ncores * _SUBLANES, _LANES),
                                       jnp.float32),
        grid_spec=pltpu.PrefetchScalarGridSpec(
            num_scalar_prefetch=0,
            grid=(ncores, steps_per_core),
            in_specs=[
                pl.BlockSpec((block_rows, _LANES), in_map),
                pl.BlockSpec((block_rows, _LANES), in_map),
            ],
            out_specs=pl.BlockSpec((_SUBLANES, _LANES), lambda c, i: (c, 0)),
        ),
        compiler_params=pltpu.CompilerParams(
            dimension_semantics=("parallel", "arbitrary"),
            vmem_limit_bytes=_VMEM_LIMIT),
    )(pred2d, true2d)

    # Final tiny cross-lane reduction + mean normalization in the wrapper.
    return (jnp.sum(partials) + tail_sum) / jnp.float32(n_valid)


def _focal_loss_ref(pred, true, gamma=GAMMA, alpha=ALPHA):
    """Direct transcription of the PyTorch module (mean reduction)."""
    x = pred.astype(jnp.float32)
    y = true.astype(jnp.float32)
    bce = jnp.maximum(x, 0.0) - x * y + jnp.log1p(jnp.exp(-jnp.abs(x)))
    p = jax.nn.sigmoid(x)
    p_t = y * p + (1 - y) * (1 - p)
    af = y * alpha + (1 - y) * (1 - alpha)
    mf = (1.0 - p_t) ** gamma
    return jnp.mean(bce * af * mf)


if __name__ == "__main__":
    key = jax.random.PRNGKey(0)
    k1, k2 = jax.random.split(key)
    # NCHW, as in the PyTorch module's typical use (per-anchor class logits).
    pred = jax.random.normal(k1, (2, 4, 16, 16), jnp.float32)
    true = (jax.random.uniform(k2, (2, 4, 16, 16)) > 0.7).astype(jnp.float32)

    ref = jax.block_until_ready(_focal_loss_ref(pred, true))

    # Exact-divide path: tight correctness check.
    out_exact = jax.block_until_ready(
        focal_loss(pred, true, approx_recip=False))
    assert jnp.allclose(out_exact, ref, rtol=1e-4, atol=1e-6), (out_exact, ref)

    # Perf path (approx EUP reciprocal): tolerance widened to cover the
    # ~1e-3-level per-element error of the hardware approx recip.
    out_fast = jax.block_until_ready(focal_loss(pred, true))
    assert jnp.allclose(out_fast, ref, rtol=5e-3, atol=1e-5), (out_fast, ref)

    print("KERNEL_OK")
</pallas_src>

<mosaic_0001>
module attributes {stable_mosaic.version = 11 : i64} {
  func.func @_focal_loss_kernel(%arg0: i32, %arg1: i32, %arg2: memref<16x128xf32, #tpu.memory_space<vmem>>, %arg3: memref<16x128xf32, #tpu.memory_space<vmem>>, %arg4: memref<8x128xf32, #tpu.memory_space<vmem>>) attributes {dimension_semantics = [#tpu.dimension_semantics<parallel>, #tpu.dimension_semantics<arbitrary>], iteration_bounds = array<i64: 1, 1>, scalar_prefetch = 0 : i64, scratch_operands = 0 : i64, tpu.core_type = #tpu.core_type<tc>, window_params = [{transform_indices = @transform_0, window_bounds = array<i64: 16, 128>}, {transform_indices = @transform_1, window_bounds = array<i64: 16, 128>}, {transform_indices = @transform_2, window_bounds = array<i64: 8, 128>}]} {
    %c0_i32 = arith.constant 0 : i32
    %0 = arith.cmpi eq, %arg1, %c0_i32 : i32
    %1 = arith.extui %0 : i1 to i32
    %c0_i32_0 = arith.constant 0 : i32
    %2 = arith.cmpi ne, %1, %c0_i32_0 : i32
    scf.if %2 {
      %cst_17 = arith.constant 0.000000e+00 : f32
      %43 = vector.broadcast %cst_17 : f32 to vector<8x128xf32>
      %c0_18 = arith.constant 0 : index
      %c0_19 = arith.constant 0 : index
      %44 = vector.load %arg4[%c0_18, %c0_19] : memref<8x128xf32, #tpu.memory_space<vmem>>, vector<8x128xf32>
      tpu.vector_store %arg4[%c0_18, %c0_19], %43 {strides = array<i32>} : memref<8x128xf32, #tpu.memory_space<vmem>>, vector<8x128xf32>,
    } else {
    }
    %c0 = arith.constant 0 : index
    %c0_1 = arith.constant 0 : index
    %3 = vector.load %arg2[%c0, %c0_1] : memref<16x128xf32, #tpu.memory_space<vmem>>, vector<16x128xf32>
    %c0_2 = arith.constant 0 : index
    %c0_3 = arith.constant 0 : index
    %4 = vector.load %arg3[%c0_2, %c0_3] : memref<16x128xf32, #tpu.memory_space<vmem>>, vector<16x128xf32>
    %5 = math.absf %3 : vector<16x128xf32>
    %cst = arith.constant 0.000000e+00 : f32
    %6 = vector.broadcast %cst : f32 to vector<16x128xf32>
    %7 = arith.subf %6, %5 : vector<16x128xf32>
    %8 = math.exp %7 : vector<16x128xf32>
    %cst_4 = arith.constant 0.000000e+00 : f32
    %9 = vector.broadcast %cst_4 : f32 to vector<16x128xf32>
    %10 = arith.maximumf %3, %9 : vector<16x128xf32>
    %11 = arith.mulf %3, %4 : vector<16x128xf32>
    %12 = arith.subf %10, %11 : vector<16x128xf32>
    %13 = math.log1p %8 : vector<16x128xf32>
    %14 = arith.addf %12, %13 : vector<16x128xf32>
    %cst_5 = arith.constant 1.000000e+00 : f32
    %15 = vector.broadcast %cst_5 : f32 to vector<16x128xf32>
    %16 = arith.addf %15, %8 : vector<16x128xf32>
    %cst_6 = arith.constant 1.000000e+00 : f32
    %17 = vector.broadcast %cst_6 : f32 to vector<16x128xf32>
    %18 = arith.divf %17, %16 : vector<16x128xf32>
    %cst_7 = arith.constant 0.000000e+00 : f32
    %19 = vector.broadcast %cst_7 : f32 to vector<16x128xf32>
    %20 = arith.cmpf oge, %3, %19 : vector<16x128xf32>
    %21 = arith.mulf %8, %18 : vector<16x128xf32>
    %22 = arith.select %20, %18, %21 : vector<16x128xi1>, vector<16x128xf32>
    %23 = arith.addf %22, %4 : vector<16x128xf32>
    %24 = arith.mulf %22, %4 : vector<16x128xf32>
    %cst_8 = arith.constant 2.000000e+00 : f32
    %25 = vector.broadcast %cst_8 : f32 to vector<16x128xf32>
    %26 = arith.mulf %25, %24 : vector<16x128xf32>
    %27 = arith.subf %23, %26 : vector<16x128xf32>
    %cst_9 = arith.constant 0.000000e+00 : f32
    %28 = vector.broadcast %cst_9 : f32 to vector<16x128xf32>
    %29 = arith.maximumf %27, %28 : vector<16x128xf32>
    %cst_10 = arith.constant -5.000000e-01 : f32
    %30 = vector.broadcast %cst_10 : f32 to vector<16x128xf32>
    %31 = arith.mulf %4, %30 : vector<16x128xf32>
    %cst_11 = arith.constant 7.500000e-01 : f32
    %32 = vector.broadcast %cst_11 : f32 to vector<16x128xf32>
    %33 = arith.addf %32, %31 : vector<16x128xf32>
    %34 = math.sqrt %29 : vector<16x128xf32>
    %35 = arith.mulf %29, %34 : vector<16x128xf32>
    %36 = arith.mulf %33, %35 : vector<16x128xf32>
    %37 = arith.mulf %14, %36 : vector<16x128xf32>
    %c0_12 = arith.constant 0 : index
    %c0_13 = arith.constant 0 : index
    %38 = vector.load %arg4[%c0_12, %c0_13] : memref<8x128xf32, #tpu.memory_space<vmem>>, vector<8x128xf32>
    %39 = vector.shape_cast %37 : vector<16x128xf32> to vector<2x8x128xf32>
    %cst_14 = arith.constant dense<0.000000e+00> : vector<8x128xf32>
    %40 = vector.multi_reduction <add>, %39, %cst_14 [0] : vector<2x8x128xf32> to vector<8x128xf32>
    %41 = arith.addf %38, %40 : vector<8x128xf32>
    %c0_15 = arith.constant 0 : index
    %c0_16 = arith.constant 0 : index
    %42 = vector.load %arg4[%c0_15, %c0_16] : memref<8x128xf32, #tpu.memory_space<vmem>>, vector<8x128xf32>
    tpu.vector_store %arg4[%c0_15, %c0_16], %41 {strides = array<i32>} : memref<8x128xf32, #tpu.memory_space<vmem>>, vector<8x128xf32>,
    return
  }
  func.func @transform_0(%arg0: i32, %arg1: i32) -> (i32, i32) {
    %c1_i32 = arith.constant 1 : i32
    %0 = arith.muli %arg0, %c1_i32 : i32
    %1 = arith.addi %0, %arg1 : i32
    %c0_i32 = arith.constant 0 : i32
    %2 = arith.minsi %1, %c0_i32 : i32
    %c0_i32_0 = arith.constant 0 : i32
    %c0_i32_1 = arith.constant 0 : i32
    return %2, %c0_i32_0 : i32, i32
  }
  func.func @transform_1(%arg0: i32, %arg1: i32) -> (i32, i32) {
    %c1_i32 = arith.constant 1 : i32
    %0 = arith.muli %arg0, %c1_i32 : i32
    %1 = arith.addi %0, %arg1 : i32
    %c0_i32 = arith.constant 0 : i32
    %2 = arith.minsi %1, %c0_i32 : i32
    %c0_i32_0 = arith.constant 0 : i32
    %c0_i32_1 = arith.constant 0 : i32
    return %2, %c0_i32_0 : i32, i32
  }
  func.func @transform_2(%arg0: i32, %arg1: i32) -> (i32, i32) {
    %c0_i32 = arith.constant 0 : i32
    %c0_i32_0 = arith.constant 0 : i32
    return %arg0, %c0_i32 : i32, i32
  }
}

</mosaic_0001>

<llo_original>
// kernel: tpu_custom_call.1
$region0: #{tpu_custom_call.1}
  #allocation0 [shape = 'u32[]', space=smem, size = 0x4, offset = 0x4, fixed_abs, tag = 'smem constant byte address 0x4 - core index']
  #allocation1 [shape = 'u32[144,128]{1,0:T(1,128)}', space=vmem, size = 0x12000, scoped, tag = 'internal scratch']
  %s0 = inlined_call_operand.hbm [shape: f32[16,128], index: 0, kind: input, shape index: {}]
  %s1 = inlined_call_operand.hbm [shape: f32[16,128], index: 1, kind: input, shape index: {}]
  %s2 = inlined_call_operand.hbm [shape: f32[8,128], index: 2, kind: output, shape index: {}]
  %s3 = sld [smem:[#allocation0]]
  $region30: #{tpu_custom_call.1} parent=0
    _
  %s5 = ssub.s32 1, %s3
  %s6 = scalar_select 0, %s5, %s3
  $region1: #{tpu_custom_call.1} parent=0
    #allocation2 [shape = 'u8[8192]{0}', space=vmem, size = 0x2000, scoped, tag = 'input window, operand 0, single buffered']
    #allocation3 [shape = 's32[1]{0}', space=sflag, size = 0x4, scoped, tag = 'scoped memory for tpu_custom_call.1']
    #allocation4 [shape = 's32[1]{0}', space=sflag, size = 0x4, scoped, tag = 'scoped memory for tpu_custom_call.1']
    #allocation5 [shape = 'u8[8192]{0}', space=vmem, size = 0x2000, scoped, tag = 'input window, operand 1, single buffered']
    #allocation6 [shape = 's32[1]{0}', space=sflag, size = 0x4, scoped, tag = 'scoped memory for tpu_custom_call.1']
    #allocation7 [shape = 'u8[4096]{0}', space=vmem, size = 0x1000, scoped, tag = 'output window, operand 0, single buffered']
    %7 = vsyncpa [#allocation3], 0
    %8 = vsyncpa [#allocation6], 0
    %9 = vsyncpa [#allocation4], 0
    // Predicated region
    $region2: #{tpu_custom_call.1} parent=1 // pred_check
      _
    $region3: #{tpu_custom_call.1} parent=1 // pred_check_branch
      %11 = sbr.rel (0) target = $region5
    $region4: #{tpu_custom_call.1} parent=1 // pred_region
      %s12 = sadd.s32 0, 0
      %p13 = scmp.lt.s32.totalorder %s12, 0
      %s14 = scalar_select %p13, %s12, 0
      %s15 = smul.u32 2, %s14
      %s17 = ssub.s32 256, 256
      %18 = vsyncadd [#allocation3], %s17
      %s19 = smul.addr %s15, 128
      %s20 = scalar_lea.hbm %s0, %s19
      %s21 = sshll.u32 [#allocation2], 4
      %s22 = int_to_ptr.vmem [resolvable:$true] %s21
      %27 = dma.hbm_to_vmem [thread:$0]  %s20, 256, %s22, [#allocation3], 128, 128, 8
    $region5: #{tpu_custom_call.1} parent=1 // pred_fallthru
      _
    // Predicated region
    $region6: #{tpu_custom_call.1} parent=1 // pred_check
      _
    $region7: #{tpu_custom_call.1} parent=1 // pred_check_branch
      %29 = sbr.rel (0) target = $region9
    $region8: #{tpu_custom_call.1} parent=1 // pred_region
      %s30 = sadd.s32 0, 0
      %p31 = scmp.lt.s32.totalorder %s30, 0
      %s32 = scalar_select %p31, %s30, 0
      %s33 = smul.u32 2, %s32
      %s35 = ssub.s32 256, 256
      %36 = vsyncadd [#allocation6], %s35
      %s37 = smul.addr %s33, 128
      %s38 = scalar_lea.hbm %s1, %s37
      %s39 = sshll.u32 [#allocation5], 4
      %s40 = int_to_ptr.vmem [resolvable:$true] %s39
      %45 = dma.hbm_to_vmem [thread:$0]  %s38, 256, %s40, [#allocation6], 128, 128, 8
    $region9: #{tpu_custom_call.1} parent=1 // pred_fallthru
      _
    // Predicated region
    $region10: #{tpu_custom_call.1} parent=1 // pred_check
      _
    $region11: #{tpu_custom_call.1} parent=1 // pred_check_branch
      %47 = sbr.rel (0) target = $region13
    $region12: #{tpu_custom_call.1} parent=1 // pred_region
      %48 = dma.done [#allocation3], 256
    $region13: #{tpu_custom_call.1} parent=1 // pred_fallthru
      _
    // Predicated region
    $region14: #{tpu_custom_call.1} parent=1 // pred_check
      _
    $region15: #{tpu_custom_call.1} parent=1 // pred_check_branch
      %50 = sbr.rel (0) target = $region17
    $region16: #{tpu_custom_call.1} parent=1 // pred_region
      %51 = dma.done [#allocation6], 256
    $region17: #{tpu_custom_call.1} parent=1 // pred_fallthru
      _
    %s52 = sadd.s32 0, 0
    %p53 = scmp.lt.s32.totalorder %s52, 0
    %s54 = scalar_select %p53, %s52, 0
    %s55 = smul.u32 2, %s54
    %s56 = sadd.s32 0, 0
    %p57 = scmp.lt.s32.totalorder %s56, 0
    %s58 = scalar_select %p57, %s56, 0
    %s59 = smul.u32 2, %s58
    %p60 = scmp.eq.s32.totalorder 0, 0
    // Predicated region
    $region18: #{tpu_custom_call.1} parent=1 // pred_check
      %p61 = pneg %p60
    $region19: #{tpu_custom_call.1} parent=1 // pred_check_branch
      %63 = sbr.rel (%p61) target = $region21
    $region20: #{tpu_custom_call.1} parent=1 // pred_region
      %64 = vst [vmem:[#allocation7] sm:$0xff] 0.0
    $region21: #{tpu_custom_call.1} parent=1 // pred_fallthru
      _
    %v65 = vld [vmem:[#allocation2] sm:$0xff]
    %v66 = vld [vmem:[#allocation2 + $0x8] sm:$0xff]
    %v67 = vld [vmem:[#allocation5] sm:$0xff]
    %v68 = vld [vmem:[#allocation5 + $0x8] sm:$0xff]
    %v69 = vand.u32 2147483647, %v65
    %v70 = vand.u32 2147483647, %v66
    %v71 = vsub.f32 0.0, %v69
    %v72 = vsub.f32 0.0, %v70
    %v73 = vmul.f32 %v71, 1.442695
    %v74 = vpow.pop %v73
    %v75 = vmul.f32 %v72, 1.442695
    %v76 = vpow.pop %v75
    %v77 = vmax.f32 %v65, 0.0
    %v78 = vmax.f32 %v66, 0.0
    %v79 = vmul.f32 %v65, %v67
    %v80 = vmul.f32 %v66, %v68
    %v81 = vsub.f32 %v77, %v79
    %v82 = vsub.f32 %v78, %v80
    %v83 = vadd.f32 %v74, 1.0
    %v84 = vlog2.pop %v83
    %v85 = vmul.f32 %v84, 0.6931472
    %v86 = vmul.f32 -0.5, %v74
    %v87 = vadd.f32 %v86, 1.0
    %v88 = vmul.f32 %v87, %v74
    %v89 = vand.u32 2147483647, %v74
    %vm90 = vcmp.lt.f32.partialorder %v89, 0.0004427343
    %v91 = vsel %vm90, %v88, %v85
    %v92 = vadd.f32 %v76, 1.0
    %v93 = vlog2.pop %v92
    %v94 = vmul.f32 %v93, 0.6931472
    %v95 = vmul.f32 -0.5, %v76
    %v96 = vadd.f32 %v95, 1.0
    %v97 = vmul.f32 %v96, %v76
    %v98 = vand.u32 2147483647, %v76
    %vm99 = vcmp.lt.f32.partialorder %v98, 0.0004427343
    %v100 = vsel %vm99, %v97, %v94
    %v101 = vadd.f32 %v81, %v91
    %v102 = vadd.f32 %v82, %v100
    %v103 = vadd.f32 %v74, 1.0
    %v104 = vadd.f32 %v76, 1.0
    %v105 = vrcp.pop %v103
    %v106 = vmul.f32 1.0, %v105
    %v107 = vrcp.pop %v104
    %v108 = vmul.f32 1.0, %v107
    %vm109 = vcmp.ge.f32.partialorder %v65, 0.0
    %vm110 = vcmp.ge.f32.partialorder %v66, 0.0
    %v111 = vmul.f32 %v74, %v106
    %v112 = vmul.f32 %v76, %v108
    %v113 = vsel %vm109, %v106, %v111
    %v114 = vsel %vm110, %v108, %v112
    %v115 = vadd.f32 %v113, %v67
    %v116 = vadd.f32 %v114, %v68
    %v117 = vmul.f32 %v113, %v67
    %v118 = vmul.f32 %v114, %v68
    %v119 = vmul.f32 %v117, 2.0
    %v120 = vmul.f32 %v118, 2.0
    %v121 = vsub.f32 %v115, %v119
    %v122 = vsub.f32 %v116, %v120
    %v123 = vmax.f32 %v121, 0.0
    %v124 = vmax.f32 %v122, 0.0
    %v125 = vmul.f32 %v67, -0.5
    %v126 = vmul.f32 %v68, -0.5
    %v127 = vadd.f32 %v125, 0.75
    %v128 = vadd.f32 %v126, 0.75
    %v129 = vrsqrt.pop %v123
    %v130 = vmul.f32 %v123, %v129
    %vm131 = vcmp.eq.f32.partialorder %v123, inf
    %v132 = vsel %vm131, %v123, %v130
    %vm133 = vcmp.eq.f32.partialorder %v123, 0.0
    %v134 = vand.u32 %v123, 2147483648
    %v135 = vsel %vm133, %v134, %v132
    %v136 = vrsqrt.pop %v124
    %v137 = vmul.f32 %v124, %v136
    %vm138 = vcmp.eq.f32.partialorder %v124, inf
    %v139 = vsel %vm138, %v124, %v137
    %vm140 = vcmp.eq.f32.partialorder %v124, 0.0
    %v141 = vand.u32 %v124, 2147483648
    %v142 = vsel %vm140, %v141, %v139
    %v143 = vmul.f32 %v123, %v135
    %v144 = vmul.f32 %v124, %v142
    %v145 = vmul.f32 %v127, %v143
    %v146 = vmul.f32 %v128, %v144
    %v147 = vmul.f32 %v101, %v145
    %v148 = vmul.f32 %v102, %v146
    %v149 = vld [vmem:[#allocation7] sm:$0xff]
    %v150 = vadd.f32 %v147, %v148
    %v151 = vadd.f32 %v149, %v150
    %152 = vst [vmem:[#allocation7] sm:$0xff] %v151
    // Predicated region
    $region22: #{tpu_custom_call.1} parent=1 // pred_check
      _
    $region23: #{tpu_custom_call.1} parent=1 // pred_check_branch
      %154 = sbr.rel (0) target = $region25
    $region24: #{tpu_custom_call.1} parent=1 // pred_region
      %s156 = ssub.s32 128, 128
      %157 = vsyncadd [#allocation4], %s156
      %s159 = sshll.u32 [#allocation7], 4
      %s160 = int_to_ptr.vmem [resolvable:$true] %s159
      %162 = dma.vmem_to_hbm [thread:$0]  %s160, 128, %s2, [#allocation4]
    $region25: #{tpu_custom_call.1} parent=1 // pred_fallthru
      _
    // Predicated region
    $region26: #{tpu_custom_call.1} parent=1 // pred_check
      _
    $region27: #{tpu_custom_call.1} parent=1 // pred_check_branch
      %164 = sbr.rel (0) target = $region29
    $region28: #{tpu_custom_call.1} parent=1 // pred_region
      %165 = dma.done [#allocation4], 128
    $region29: #{tpu_custom_call.1} parent=1 // pred_fallthru
      _
    %166 = vsyncpa [#allocation3], 1
    %167 = vsyncpa [#allocation6], 1
    %168 = vsyncpa [#allocation4], 1

</llo_original>
